<compile_context>
chip_gen: v5e
topology: v5e:2x2
jax: 0.10.0
libtpu: 0.0.40
codegen_flags: <defaults>
</compile_context>

<pallas_src>
import random

import jax
import jax.numpy as jnp
from jax.experimental import pallas as pl
from jax.experimental.pallas import tpu as pltpu


# ------------------------------- kernel -------------------------------------

def _pinball_kernel(tau_ref, yt_ref, yp_ref, cw_ref, out_ref):
    """Pinball-loss partial-sum kernel.

    tau_ref : SMEM (1,)       scalar-prefetched quantile
    yt_ref  : VMEM (TR, TL)   true values tile (native dtype)
    yp_ref  : VMEM (TR, TL)   predicted values tile (native dtype)
    cw_ref  : VMEM (TR, 1)    per-row (per-(n, c)) channel weights, f32
    out_ref : VMEM (TR, 128)  lane-dense per-row-tile partial sums; this block
                              is revisited across the lane (reduction) axis.
    """
    j = pl.program_id(1)

    @pl.when(j == 0)
    def _():
        out_ref[...] = jnp.zeros_like(out_ref)

    tau = tau_ref[0]
    e = (yt_ref[...].astype(jnp.float32)
         - yp_ref[...].astype(jnp.float32)) * cw_ref[...]     # (TR,1) bcast over lanes
    # max(tau*e, (tau-1)*e) == tau*e - min(e, 0)   (one fewer vmul per element)
    loss = tau * e - jnp.minimum(e, 0.0)                       # (TR, TL)

    # Fold the TL lanes down to one 128-lane slab with plain VPU adds.  The
    # slices are static and lane-tile aligned (no relayout); the adds are free
    # slack in an HBM-bound kernel.  Keeps the live accumulator at (TR, 128).
    part = loss[:, :128]
    for c in range(1, loss.shape[1] // 128):
        part = part + loss[:, c * 128:(c + 1) * 128]
    out_ref[...] += part


# --------------------------- tiling selection --------------------------------

_LANE_TILE_CANDIDATES = (8192, 4096, 2048, 1024, 512, 256)
_ROW_TILE_CANDIDATES = (1024, 512, 256, 128, 64, 32, 16, 8)
_PER_TILE_BYTES_CAP = 4 * 1024 * 1024       # ~2-4 MiB input tiles amortize step cost
_SMALL_TILE_BYTES = 512 * 1024              # below this, deepen the input pipeline


def _round_up(x, m):
    return -(-x // m) * m


def _choose_lane_tiling(L):
    """Return (TL, L_pad): lane-tile size and (possibly padded) lane extent."""
    L128 = _round_up(L, 128)
    if L128 <= _LANE_TILE_CANDIDATES[0]:
        return L128, L128                            # whole lane axis in one tile
    # Prefer a large exact divisor (no padding copy needed).
    for c in _LANE_TILE_CANDIDATES:
        if c >= 1024 and L % c == 0:
            return c, L
    # Otherwise pad: bounded (<~6%) extra streamed data keeps the per-step DMA
    # large relative to the ~0.35us fixed grid-step overhead.
    for c in _LANE_TILE_CANDIDATES:
        padded = _round_up(L, c)
        if padded - L128 <= max(L128 // 16, 128):
            return c, padded
    return 128, L128


def _choose_row_tiling(R, TL, itemsize):
    """Return (TR, R_pad): row-tile size and (possibly padded) row extent."""
    row_mult = max(8, 32 // max(int(itemsize), 1))   # f32: 8, bf16: 16, 8-bit: 32
    if R % row_mult and R % 8 == 0:
        row_mult = 8        # don't force a padding copy just for packed-row alignment
    R_pad = _round_up(R, row_mult)
    fits = [c for c in _ROW_TILE_CANDIDATES
            if c % row_mult == 0 and c <= R_pad and R_pad % c == 0
            and c * TL * itemsize <= _PER_TILE_BYTES_CAP]
    if not fits:
        fits = [row_mult]
    # Prefer >= 2 row blocks so both v7x TensorCores stream HBM concurrently.
    two_plus = [c for c in fits if R_pad // c >= 2]
    return (max(two_plus) if two_plus else max(fits)), R_pad


# ------------------------------- wrapper -------------------------------------

def pinball_loss_pallas(y_true, y_pred, tau, channel_weights=None):
    """mean(max(tau*e, (tau-1)*e)) with e = (y_true - y_pred) * channel_weight[c]."""
    N, C, H, W = y_true.shape
    R, L = N * C, H * W
    itemsize = max(jnp.dtype(y_true.dtype).itemsize, jnp.dtype(y_pred.dtype).itemsize)

    TL, L_pad = _choose_lane_tiling(L)
    TR, R_pad = _choose_row_tiling(R, TL, itemsize)
    n_row, n_lane = R_pad // TR, L_pad // TL

    # Flatten NCHW -> (rows = N*C, lanes = H*W); contiguous reshape, no copy.
    yt = y_true.reshape(R, L)
    yp = y_pred.reshape(R, L)
    if R_pad > R or L_pad > L:
        # Correctness fallback for awkward shapes: zero padding contributes
        # exactly zero loss; we divide by the true element count below.
        # TODO(synk): in-kernel tail masking (iota vs the true extent) would
        # avoid this extra HBM pad copy when H*W is not a multiple of 128.
        pad = ((0, R_pad - R), (0, L_pad - L))
        yt = jnp.pad(yt, pad)
        yp = jnp.pad(yp, pad)

    if channel_weights is None:
        cw_rows = jnp.ones((R,), jnp.float32)
    else:
        cw = jnp.asarray(channel_weights, jnp.float32).reshape(-1)
        assert cw.shape[0] == C, "channel_weights must have one entry per channel"
        cw_rows = jnp.tile(cw, (N,))                           # row r -> weight[r % C]
    if R_pad > R:
        cw_rows = jnp.concatenate([cw_rows, jnp.zeros((R_pad - R,), jnp.float32)])
    cw_rows = cw_rows.reshape(R_pad, 1)

    tile_bytes = TR * TL * itemsize
    n_buf = 3 if (tile_bytes <= _SMALL_TILE_BYTES and n_lane >= 4) else 2
    if n_buf == 3:
        in_spec = pl.BlockSpec((TR, TL), lambda i, j, tau: (i, j),
                               pipeline_mode=pl.Buffered(3))
    else:
        in_spec = pl.BlockSpec((TR, TL), lambda i, j, tau: (i, j))

    # Explicit scoped-VMEM budget: 2 inputs x n_buf buffers + weights + the
    # double-buffered (TR,128) output accumulator, plus margin.  Needed so the
    # 2-4 MiB tiles also work under v5e's 16 MiB default scoped limit while
    # staying well inside v7x's 64 MiB physical VMEM.
    working = (2 * n_buf * tile_bytes           # yt / yp tiles
               + n_buf * TR * 128 * 4           # (TR,1) f32 weights (lane-padded bound)
               + 2 * TR * 128 * 4)              # output accumulator blocks
    vmem_limit = int(min(48 * 1024 * 1024,
                         max(24 * 1024 * 1024, working + (8 << 20))))

    tau_arr = jnp.asarray([tau], jnp.float32)

    out = pl.pallas_call(
        _pinball_kernel,
        out_shape=jax.ShapeDtypeStruct((R_pad, 128), jnp.float32),
        grid_spec=pltpu.PrefetchScalarGridSpec(
            num_scalar_prefetch=1,                             # tau -> SMEM
            grid=(n_row, n_lane),                              # rows parallel, lanes reduce
            in_specs=[
                in_spec,
                in_spec,
                pl.BlockSpec((TR, 1), lambda i, j, tau: (i, 0)),
            ],
            out_specs=pl.BlockSpec((TR, 128), lambda i, j, tau: (i, 0)),
        ),
        compiler_params=pltpu.CompilerParams(
            dimension_semantics=("parallel", "arbitrary"),
            vmem_limit_bytes=vmem_limit),
    )(tau_arr, yt, yp, cw_rows)

    # Final reduce of the small (R_pad, 128) lane-dense partials in XLA
    # (pairwise summation); divide by the TRUE element count (padding = 0).
    return jnp.sum(out) * (1.0 / float(R * L))


class RandomizedPinballLoss:
    """JAX/Pallas port of dlsia.core.networks.cerberus.RandomizedPinballLoss."""

    def __init__(self, quantiles, biases=None, channel_weights=None, seed=0):
        assert len(quantiles) == len(biases) if biases else True, \
            'Length of quantiles must match length of biases'
        self.quantiles = quantiles
        self.biases = biases if biases else [1] * len(quantiles)
        self.channel_weights = channel_weights
        self._rng = random.Random(seed)                        # deterministic host RNG

    def __call__(self, predictions, y_true):
        total_bias = sum(self.biases)
        probabilities = [b / total_bias for b in self.biases]
        index = self._rng.choices(range(len(self.quantiles)),
                                  weights=probabilities, k=1)[0]
        selected_quantile = self.quantiles[index]
        selected_prediction = predictions[index]
        return pinball_loss_pallas(y_true, selected_prediction,
                                   selected_quantile, self.channel_weights)


# ------------------------------ reference ------------------------------------

def _reference_pinball(y_true, y_pred, tau, channel_weights):
    e = y_true.astype(jnp.float32) - y_pred.astype(jnp.float32)
    if channel_weights is not None:
        e = e * jnp.asarray(channel_weights, jnp.float32).reshape(1, -1, 1, 1)
    return jnp.mean(jnp.maximum(tau * e, (tau - 1.0) * e))


if __name__ == "__main__":
    key = jax.random.PRNGKey(0)
    N, C, H, W = 2, 4, 16, 16
    quantiles = [0.25, 0.5, 0.75]
    biases = [1.0, 2.0, 1.0]

    keys = jax.random.split(key, 12)
    y_true = jax.random.normal(keys[0], (N, C, H, W), jnp.float32)
    predictions = [
        jax.random.normal(keys[1], (N, C, H, W), jnp.float32),
        jax.random.normal(keys[2], (N, C, H, W), jnp.float32),
        jax.random.normal(keys[3], (N, C, H, W), jnp.float32),
    ]
    channel_weights = jax.random.uniform(keys[4], (C,), jnp.float32) + 0.5

    loss_mod = RandomizedPinballLoss(quantiles, biases=biases,
                                     channel_weights=channel_weights, seed=0)

    # Replicate the module's random selection so we know which quantile it chose.
    probe_rng = random.Random(0)
    total_bias = sum(biases)
    probs = [b / total_bias for b in biases]
    sel_idx = probe_rng.choices(range(len(quantiles)), weights=probs, k=1)[0]

    loss = jax.block_until_ready(loss_mod(predictions, y_true))
    ref = _reference_pinball(y_true, predictions[sel_idx],
                             quantiles[sel_idx], channel_weights)
    assert jnp.allclose(loss, ref, rtol=1e-5, atol=1e-6), (loss, ref)

    # Multi-lane-step path (L = 16384 -> TL = 8192, 2 lane steps), f32 + bf16.
    yt_big = jax.random.normal(keys[5], (2, 4, 64, 256), jnp.float32)
    yp_big = jax.random.normal(keys[6], (2, 4, 64, 256), jnp.float32)
    l_big = jax.block_until_ready(
        pinball_loss_pallas(yt_big, yp_big, 0.3, channel_weights))
    r_big = _reference_pinball(yt_big, yp_big, 0.3, channel_weights)
    assert jnp.allclose(l_big, r_big, rtol=1e-5, atol=1e-6), (l_big, r_big)

    yt_bf, yp_bf = yt_big.astype(jnp.bfloat16), yp_big.astype(jnp.bfloat16)
    l_bf = jax.block_until_ready(
        pinball_loss_pallas(yt_bf, yp_bf, 0.75, channel_weights))
    r_bf = _reference_pinball(yt_bf.astype(jnp.float32),
                              yp_bf.astype(jnp.float32), 0.75, channel_weights)
    assert jnp.allclose(l_bf, r_bf, rtol=2e-4, atol=1e-5), (l_bf, r_bf)

    # Multi-row-tile path (R = 32 -> TR = 16, 2 "parallel" row blocks).
    yt_r = jax.random.normal(keys[7], (4, 8, 32, 128), jnp.float32)
    yp_r = jax.random.normal(keys[8], (4, 8, 32, 128), jnp.float32)
    l_r = jax.block_until_ready(pinball_loss_pallas(yt_r, yp_r, 0.5, None))
    r_r = _reference_pinball(yt_r, yp_r, 0.5, None)
    assert jnp.allclose(l_r, r_r, rtol=1e-5, atol=1e-6), (l_r, r_r)

    # Awkward lane extent (H*W = 1000 -> padded to 1024) exercising the pad path.
    yt_p = jax.random.normal(keys[9], (2, 4, 20, 50), jnp.float32)
    yp_p = jax.random.normal(keys[10], (2, 4, 20, 50), jnp.float32)
    l_p = jax.block_until_ready(
        pinball_loss_pallas(yt_p, yp_p, 0.25, channel_weights))
    r_p = _reference_pinball(yt_p, yp_p, 0.25, channel_weights)
    assert jnp.allclose(l_p, r_p, rtol=1e-5, atol=1e-6), (l_p, r_p)

    # Small-tile / many-lane-step path (exercises the Buffered(3) pipeline).
    yt_s = jax.random.normal(keys[11], (2, 4, 16, 4096), jnp.float32)
    yp_s = jax.random.normal(keys[0], (2, 4, 16, 4096), jnp.float32)
    l_s = jax.block_until_ready(pinball_loss_pallas(yt_s, yp_s, 0.9, None))
    r_s = _reference_pinball(yt_s, yp_s, 0.9, None)
    assert jnp.allclose(l_s, r_s, rtol=1e-5, atol=1e-6), (l_s, r_s)

    print("KERNEL_OK")
</pallas_src>

<mosaic_0001>
module attributes {stable_mosaic.version = 11 : i64} {
  func.func @_pinball_kernel(%arg0: i32, %arg1: i32, %arg2: memref<1xf32, #tpu.memory_space<smem>>, %arg3: memref<8x256xf32, #tpu.memory_space<vmem>>, %arg4: memref<8x256xf32, #tpu.memory_space<vmem>>, %arg5: memref<8x1xf32, #tpu.memory_space<vmem>>, %arg6: memref<8x128xf32, #tpu.memory_space<vmem>>) attributes {dimension_semantics = [#tpu.dimension_semantics<parallel>, #tpu.dimension_semantics<arbitrary>], iteration_bounds = array<i64: 1, 1>, scalar_prefetch = 1 : i64, scratch_operands = 0 : i64, tpu.core_type = #tpu.core_type<tc>, window_params = [{transform_indices = @transform_0, window_bounds = array<i64: 8, 256>}, {transform_indices = @transform_1, window_bounds = array<i64: 8, 256>}, {transform_indices = @transform_2, window_bounds = array<i64: 8, 1>}, {transform_indices = @transform_3, window_bounds = array<i64: 8, 128>}]} {
    %c0_i32 = arith.constant 0 : i32
    %0 = arith.cmpi eq, %arg1, %c0_i32 : i32
    %1 = arith.extui %0 : i1 to i32
    %c0_i32_0 = arith.constant 0 : i32
    %2 = arith.cmpi ne, %1, %c0_i32_0 : i32
    scf.if %2 {
      %cst_11 = arith.constant 0.000000e+00 : f32
      %21 = vector.broadcast %cst_11 : f32 to vector<8x128xf32>
      %c0_12 = arith.constant 0 : index
      %c0_13 = arith.constant 0 : index
      %22 = vector.load %arg6[%c0_12, %c0_13] : memref<8x128xf32, #tpu.memory_space<vmem>>, vector<8x128xf32>
      tpu.vector_store %arg6[%c0_12, %c0_13], %21 {strides = array<i32>} : memref<8x128xf32, #tpu.memory_space<vmem>>, vector<8x128xf32>,
    } else {
    }
    %c0 = arith.constant 0 : index
    %3 = memref.load %arg2[%c0] : memref<1xf32, #tpu.memory_space<smem>>
    %c0_1 = arith.constant 0 : index
    %c0_2 = arith.constant 0 : index
    %4 = vector.load %arg3[%c0_1, %c0_2] : memref<8x256xf32, #tpu.memory_space<vmem>>, vector<8x256xf32>
    %c0_3 = arith.constant 0 : index
    %c0_4 = arith.constant 0 : index
    %5 = vector.load %arg4[%c0_3, %c0_4] : memref<8x256xf32, #tpu.memory_space<vmem>>, vector<8x256xf32>
    %6 = arith.subf %4, %5 : vector<8x256xf32>
    %c0_5 = arith.constant 0 : index
    %c0_6 = arith.constant 0 : index
    %7 = vector.load %arg5[%c0_5, %c0_6] : memref<8x1xf32, #tpu.memory_space<vmem>>, vector<8x1xf32>
    %8 = vector.broadcast %7 : vector<8x1xf32> to vector<8x256xf32>
    %9 = arith.mulf %6, %8 : vector<8x256xf32>
    %10 = vector.broadcast %3 : f32 to vector<8x256xf32>
    %11 = arith.mulf %10, %9 : vector<8x256xf32>
    %cst = arith.constant 0.000000e+00 : f32
    %12 = vector.broadcast %cst : f32 to vector<8x256xf32>
    %13 = arith.minimumf %9, %12 : vector<8x256xf32>
    %14 = arith.subf %11, %13 : vector<8x256xf32>
    %15 = vector.extract_strided_slice %14 {offsets = [0, 0], sizes = [8, 128], strides = [1, 1]} : vector<8x256xf32> to vector<8x128xf32>
    %16 = vector.extract_strided_slice %14 {offsets = [0, 128], sizes = [8, 128], strides = [1, 1]} : vector<8x256xf32> to vector<8x128xf32>
    %17 = arith.addf %15, %16 : vector<8x128xf32>
    %c0_7 = arith.constant 0 : index
    %c0_8 = arith.constant 0 : index
    %18 = vector.load %arg6[%c0_7, %c0_8] : memref<8x128xf32, #tpu.memory_space<vmem>>, vector<8x128xf32>
    %19 = arith.addf %18, %17 : vector<8x128xf32>
    %c0_9 = arith.constant 0 : index
    %c0_10 = arith.constant 0 : index
    %20 = vector.load %arg6[%c0_9, %c0_10] : memref<8x128xf32, #tpu.memory_space<vmem>>, vector<8x128xf32>
    tpu.vector_store %arg6[%c0_9, %c0_10], %19 {strides = array<i32>} : memref<8x128xf32, #tpu.memory_space<vmem>>, vector<8x128xf32>,
    return
  }
  func.func @transform_0(%arg0: i32, %arg1: i32, %arg2: memref<1xf32, #tpu.memory_space<smem>>) -> (i32, i32) {
    %c0_i32 = arith.constant 0 : i32
    return %arg0, %arg1 : i32, i32
  }
  func.func @transform_1(%arg0: i32, %arg1: i32, %arg2: memref<1xf32, #tpu.memory_space<smem>>) -> (i32, i32) {
    %c0_i32 = arith.constant 0 : i32
    return %arg0, %arg1 : i32, i32
  }
  func.func @transform_2(%arg0: i32, %arg1: i32, %arg2: memref<1xf32, #tpu.memory_space<smem>>) -> (i32, i32) {
    %c0_i32 = arith.constant 0 : i32
    %c0_i32_0 = arith.constant 0 : i32
    return %arg0, %c0_i32 : i32, i32
  }
  func.func @transform_3(%arg0: i32, %arg1: i32, %arg2: memref<1xf32, #tpu.memory_space<smem>>) -> (i32, i32) {
    %c0_i32 = arith.constant 0 : i32
    %c0_i32_0 = arith.constant 0 : i32
    return %arg0, %c0_i32 : i32, i32
  }
}

</mosaic_0001>

<llo_original>
// kernel: tpu_custom_call.1
$region0: #{tpu_custom_call.1}
  #allocation0 [shape = 'u32[]', space=smem, size = 0x4, offset = 0x4, fixed_abs, tag = 'smem constant byte address 0x4 - core index']
  #allocation1 [shape = 'u32[72,128]{1,0:T(1,128)}', space=vmem, size = 0x9000, scoped, tag = 'internal scratch']
  #allocation2 [shape = 's32[1]{0}', space=sflag, size = 0x4, scoped, tag = 'scoped memory for tpu_custom_call.1']
  #allocation3 [shape = 'f32[1]{0:T(128)S(6)}', space=smem, size = 0x200, scoped, tag = 'prefetched SMEM operand 0']
  %s0 = inlined_call_operand.<no memory space> [shape: f32[1], index: 0, kind: input, shape index: {}]
  %s1 = inlined_call_operand.hbm [shape: f32[8,256], index: 1, kind: input, shape index: {}]
  %s2 = inlined_call_operand.hbm [shape: f32[8,256], index: 2, kind: input, shape index: {}]
  %s3 = inlined_call_operand.vmem [shape: f32[8,1], index: 3, kind: input, shape index: {}]
  %s4 = inlined_call_operand.hbm [shape: f32[8,128], index: 4, kind: output, shape index: {}]
  %s5 = sld [smem:[#allocation0]]
  $region34: #{tpu_custom_call.1} parent=0
    _
  %s7 = ssub.s32 1, %s5
  %s8 = scalar_select 0, %s7, %s5
  %9 = sst [smem:[#allocation3]] %s0
  $region1: #{tpu_custom_call.1} parent=0
    #allocation4 [shape = 'u8[8192]{0}', space=vmem, size = 0x2000, scoped, tag = 'input window, operand 1, single buffered']
    #allocation5 [shape = 's32[1]{0}', space=sflag, size = 0x4, scoped, tag = 'scoped memory for tpu_custom_call.1']
    #allocation6 [shape = 's32[1]{0}', space=sflag, size = 0x4, scoped, tag = 'scoped memory for tpu_custom_call.1']
    #allocation7 [shape = 'u8[8192]{0}', space=vmem, size = 0x2000, scoped, tag = 'input window, operand 2, single buffered']
    #allocation8 [shape = 's32[1]{0}', space=sflag, size = 0x4, scoped, tag = 'scoped memory for tpu_custom_call.1']
    #allocation9 [shape = 'u8[4096]{0}', space=vmem, size = 0x1000, scoped, tag = 'output window, operand 0, single buffered']
    %10 = vsyncpa [#allocation5], 0
    %11 = vsyncpa [#allocation8], 0
    %12 = vsyncpa [#allocation6], 0
    // Predicated region
    $region2: #{tpu_custom_call.1} parent=1 // pred_check
      _
    $region3: #{tpu_custom_call.1} parent=1 // pred_check_branch
      %14 = sbr.rel (0) target = $region5
    $region4: #{tpu_custom_call.1} parent=1 // pred_region
      %16 = vsyncadd [#allocation5], 0
      %s18 = sshll.u32 %s1, 4
      %s19 = int_to_ptr.hbm [resolvable:$true] %s18
      %s20 = sshll.u32 [#allocation4], 4
      %s21 = int_to_ptr.vmem [resolvable:$true] %s20
      %23 = dma.hbm_to_vmem [thread:$0]  %s19, 256, %s21, [#allocation5]
    $region5: #{tpu_custom_call.1} parent=1 // pred_fallthru
      _
    // Predicated region
    $region6: #{tpu_custom_call.1} parent=1 // pred_check
      _
    $region7: #{tpu_custom_call.1} parent=1 // pred_check_branch
      %25 = sbr.rel (0) target = $region9
    $region8: #{tpu_custom_call.1} parent=1 // pred_region
      %27 = vsyncadd [#allocation8], 0
      %s29 = sshll.u32 %s2, 4
      %s30 = int_to_ptr.hbm [resolvable:$true] %s29
      %s31 = sshll.u32 [#allocation7], 4
      %s32 = int_to_ptr.vmem [resolvable:$true] %s31
      %34 = dma.hbm_to_vmem [thread:$0]  %s30, 256, %s32, [#allocation8]
    $region9: #{tpu_custom_call.1} parent=1 // pred_fallthru
      _
    // Predicated region
    $region10: #{tpu_custom_call.1} parent=1 // pred_check
      _
    $region11: #{tpu_custom_call.1} parent=1 // pred_check_branch
      %36 = sbr.rel (0) target = $region13
    $region12: #{tpu_custom_call.1} parent=1 // pred_region
      _
    $region13: #{tpu_custom_call.1} parent=1 // pred_fallthru
      _
    // Predicated region
    $region14: #{tpu_custom_call.1} parent=1 // pred_check
      _
    $region15: #{tpu_custom_call.1} parent=1 // pred_check_branch
      %38 = sbr.rel (0) target = $region17
    $region16: #{tpu_custom_call.1} parent=1 // pred_region
      %40 = dma.done [#allocation5], 256
    $region17: #{tpu_custom_call.1} parent=1 // pred_fallthru
      _
    // Predicated region
    $region18: #{tpu_custom_call.1} parent=1 // pred_check
      _
    $region19: #{tpu_custom_call.1} parent=1 // pred_check_branch
      %42 = sbr.rel (0) target = $region21
    $region20: #{tpu_custom_call.1} parent=1 // pred_region
      %44 = dma.done [#allocation8], 256
    $region21: #{tpu_custom_call.1} parent=1 // pred_fallthru
      _
    %p45 = scmp.eq.s32.totalorder 0, 0
    // Predicated region
    $region22: #{tpu_custom_call.1} parent=1 // pred_check
      %p46 = pneg %p45
    $region23: #{tpu_custom_call.1} parent=1 // pred_check_branch
      %48 = sbr.rel (%p46) target = $region25
    $region24: #{tpu_custom_call.1} parent=1 // pred_region
      %49 = vst [vmem:[#allocation9] sm:$0xff] 0.0
    $region25: #{tpu_custom_call.1} parent=1 // pred_fallthru
      _
    %s50 = sld [smem:[#allocation3]]
    %v51 = vld [vmem:[#allocation4] sm:$0xff]
    %v52 = vld [vmem:[#allocation4 + $0x8] sm:$0xff]
    %v53 = vld [vmem:[#allocation7] sm:$0xff]
    %v54 = vld [vmem:[#allocation7 + $0x8] sm:$0xff]
    %v55 = vsub.f32 %v51, %v53
    %v56 = vsub.f32 %v52, %v54
    %v57 = vld [vmem:[%s3] sm:$0xff]
    %59 = vset.pattern.permute.xlu0 0
    %60 = vperm.xlu0 %59, %v57
    %v61 = vpop.permute.xlu0 %60
    %v63 = vmul.f32 %v55, %v61
    %v64 = vmul.f32 %v56, %v61
    %v65 = vstv %s50
    %v66 = vmul.f32 %v65, %v63
    %v67 = vmul.f32 %v65, %v64
    %v68 = vmin.f32 %v63, 0.0
    %v69 = vmin.f32 %v64, 0.0
    %v70 = vsub.f32 %v66, %v68
    %v71 = vsub.f32 %v67, %v69
    %v72 = vadd.f32 %v70, %v71
    %v73 = vld [vmem:[#allocation9] sm:$0xff]
    %v74 = vadd.f32 %v73, %v72
    %75 = vst [vmem:[#allocation9] sm:$0xff] %v74
    // Predicated region
    $region26: #{tpu_custom_call.1} parent=1 // pred_check
      _
    $region27: #{tpu_custom_call.1} parent=1 // pred_check_branch
      %77 = sbr.rel (0) target = $region29
    $region28: #{tpu_custom_call.1} parent=1 // pred_region
      %79 = vsyncadd [#allocation6], 0
      %s81 = sshll.u32 [#allocation9], 4
      %s82 = int_to_ptr.vmem [resolvable:$true] %s81
      %s83 = sshll.u32 %s4, 4
      %s84 = int_to_ptr.hbm [resolvable:$true] %s83
      %86 = dma.vmem_to_hbm [thread:$0]  %s82, 128, %s84, [#allocation6]
    $region29: #{tpu_custom_call.1} parent=1 // pred_fallthru
      _
    // Predicated region
    $region30: #{tpu_custom_call.1} parent=1 // pred_check
      _
    $region31: #{tpu_custom_call.1} parent=1 // pred_check_branch
      %88 = sbr.rel (0) target = $region33
    $region32: #{tpu_custom_call.1} parent=1 // pred_region
      %90 = dma.done [#allocation6], 128
    $region33: #{tpu_custom_call.1} parent=1 // pred_fallthru
      _
    %91 = vsyncpa [#allocation5], 1
    %92 = vsyncpa [#allocation8], 1
    %93 = vsyncpa [#allocation6], 1

</llo_original>
